<compile_context>
chip_gen: v7x
topology: tpu7x:2x2x1
jax: 0.10.0
libtpu: 0.0.40
codegen_flags: <defaults>
</compile_context>

<pallas_src>
import functools

import jax
import jax.numpy as jnp
from jax import lax
from jax.experimental import pallas as pl
from jax.experimental.pallas import tpu as pltpu

_LANE = 128


def _round_up(x, m):
    return ((x + m - 1) // m) * m


def _detect_vmem_limit():
    # ~48 MiB on v7x (64 MiB physical VMEM), ~96 MiB on v5e/v6e (128 MiB).
    try:
        cap = int(pltpu.get_tpu_info().vmem_capacity_bytes)
    except Exception:
        cap = 64 * 1024 * 1024
    return max(32 * 1024 * 1024, min((cap * 3) // 4, 100 * 1024 * 1024))


_VMEM_LIMIT = _detect_vmem_limit()
_BIG_TILES = _VMEM_LIMIT > 64 * 1024 * 1024      # 128-MiB VMEM parts (v5e/v6e)


def _mosaic_params(n_grid_dims):
    return pltpu.CompilerParams(
        dimension_semantics=("parallel",) * n_grid_dims,
        vmem_limit_bytes=_VMEM_LIMIT)


def _choose_tiles(M, N):
    """Lane-dense, generation-aware (tm, tn); ensure >=2 grid steps when cheap
    so v7x's two TensorCores both get work."""
    tm_cands = (1024, 512, 256, 128) if _BIG_TILES else (512, 256, 128)
    tm = next((c for c in tm_cands if M >= c), M)
    tn = N if N <= 512 else 512
    if pl.cdiv(M, tm) == 1 and pl.cdiv(N, tn) == 1:
        if N >= 256 and N % 256 == 0:
            tn = min(N // 2, 512)
        elif M >= 256 and M % 128 == 0:
            tm = M // 2
    return tm, tn


def _row_tile(h, cap=16):
    return max(d for d in range(1, min(h, cap) + 1) if h % d == 0)


# ----------------------------------------------------------------------------
# Pallas kernels
# ----------------------------------------------------------------------------
def _mm_bias_kernel(a_ref, w_ref, b_ref, o_ref, *, relu):
    """out = [relu](a @ w + b) — conv(+folded BN) as a tiled matmul."""
    acc = jnp.dot(a_ref[...], w_ref[...], preferred_element_type=jnp.float32)
    acc = acc + b_ref[...]
    if relu:
        acc = jnp.maximum(acc, 0.0)
    o_ref[...] = acc.astype(o_ref.dtype)


def _mm_bias_res_relu_kernel(a_ref, w_ref, b_ref, r_ref, o_ref):
    """out = relu(a @ w + b + residual) — bottleneck tail fusion."""
    acc = jnp.dot(a_ref[...], w_ref[...], preferred_element_type=jnp.float32)
    acc = acc + b_ref[...] + r_ref[...].astype(jnp.float32)
    o_ref[...] = jnp.maximum(acc, 0.0).astype(o_ref.dtype)


def _conv3x3_s1_kernel(x_ref, w_ref, b_ref, o_ref, *, th, W, cin, relu):
    """3x3 / stride-1 / pad-1 conv, one (image, cout-tile, row-tile) block.

    Loads a (th+2)-row halo strip of the padded image once, builds the
    (th*W, 9*cin) im2col LHS in VMEM (9 shifted slices concatenated along
    lanes) and issues a single K = 9*cin MXU dot with f32 accumulation.
    Valid output rows are written directly (no post-kernel remap)."""
    r0 = pl.program_id(2) * th
    rows = x_ref[0, pl.ds(r0, th + 2), :, :]                  # (th+2, Wp, cin)
    taps = [rows[di:di + th, dj:dj + W, :]
            for di in range(3) for dj in range(3)]
    lhs = jnp.concatenate(taps, axis=-1).reshape(th * W, 9 * cin)
    acc = jnp.dot(lhs, w_ref[...], preferred_element_type=jnp.float32)
    acc = acc + b_ref[...]
    if relu:
        acc = jnp.maximum(acc, 0.0)
    o_ref[0] = acc.reshape(th, W, o_ref.shape[-1]).astype(o_ref.dtype)


def _bottleneck_id_kernel(x_ref, w1_ref, b1_ref, w2_ref, b2_ref, w3_ref, b3_ref,
                          o_ref, pad_ref, *, H, W, cmid):
    """Whole identity bottleneck (1x1 -> 3x3(s1,p1) -> 1x1 + residual, ReLU)
    for one image, entirely in VMEM: one pallas_call per block."""
    cio = x_ref.shape[-1]
    xf = x_ref[0].reshape(H * W, cio)
    # conv1 (1x1) + folded BN + relu
    h1 = jnp.dot(xf, w1_ref[...], preferred_element_type=jnp.float32) + b1_ref[...]
    h1 = jnp.maximum(h1, 0.0).astype(jnp.bfloat16)
    # zero-padded mid activation kept in VMEM scratch
    pad_ref[...] = jnp.zeros(pad_ref.shape, pad_ref.dtype)
    pad_ref[1:H + 1, 1:W + 1, :] = h1.reshape(H, W, cmid)
    # conv2 (3x3): in-VMEM im2col + one K=9*cmid dot
    taps = [pad_ref[di:di + H, dj:dj + W, :]
            for di in range(3) for dj in range(3)]
    lhs = jnp.concatenate(taps, axis=-1).reshape(H * W, 9 * cmid)
    h2 = jnp.dot(lhs, w2_ref[...], preferred_element_type=jnp.float32) + b2_ref[...]
    h2 = jnp.maximum(h2, 0.0).astype(jnp.bfloat16)
    # conv3 (1x1) + residual + relu
    h3 = jnp.dot(h2, w3_ref[...], preferred_element_type=jnp.float32) + b3_ref[...]
    out = jnp.maximum(h3 + xf.astype(jnp.float32), 0.0)
    o_ref[0] = out.reshape(H, W, cio).astype(o_ref.dtype)


def _pool_heads_kernel(x_ref, w_ref, b_ref, o_ref, *, bg_thresh, inv_hw):
    """Fused AdaptiveAvgPool2d((1,1)) + flatten + (main ++ aux) linear heads,
    pooled and matmul'ed in full f32 precision."""
    x = x_ref[...].astype(jnp.float32)                        # (N, H*W, C)
    feat = jnp.sum(x, axis=1) * jnp.float32(inv_hw)           # (N, C)
    logits = jnp.dot(feat, w_ref[...],
                     preferred_element_type=jnp.float32) + b_ref[...]
    # NOTE: Python truthiness on purpose — mirrors `if self.bg_thresh:` in
    # the PyTorch ThresholdLinear (a threshold of exactly 0.0 disables it).
    if bg_thresh:
        col = lax.broadcasted_iota(jnp.int32, logits.shape, 1)
        logits = jnp.where(col == 0, jnp.float32(bg_thresh), logits)
    o_ref[...] = logits


# ----------------------------------------------------------------------------
# Pallas wrappers
# ----------------------------------------------------------------------------
def matmul_bias(a, w, b, *, relu, residual=None):
    """Tiled matmul with fused bias / residual / relu.

    Grid is (N-tiles, M-tiles) with M innermost so each (K, tn) weight block
    is DMA'd exactly once and reused across all M tiles."""
    M, K = a.shape
    K2, N = w.shape
    assert K == K2
    tm, tn = _choose_tiles(M, N)
    grid = (pl.cdiv(N, tn), pl.cdiv(M, tm))

    a_spec = pl.BlockSpec((tm, K), lambda j, i: (i, 0))
    w_spec = pl.BlockSpec((K, tn), lambda j, i: (0, j))
    b_spec = pl.BlockSpec((1, tn), lambda j, i: (0, j))
    o_spec = pl.BlockSpec((tm, tn), lambda j, i: (i, j))
    out_shape = jax.ShapeDtypeStruct((M, N), jnp.bfloat16)

    if residual is None:
        kern = functools.partial(_mm_bias_kernel, relu=relu)
        in_specs = [a_spec, w_spec, b_spec]
        args = (a, w, b)
    else:
        kern = _mm_bias_res_relu_kernel
        in_specs = [a_spec, w_spec, b_spec,
                    pl.BlockSpec((tm, tn), lambda j, i: (i, j))]
        args = (a, w, b, residual)

    return pl.pallas_call(
        kern, grid=grid, in_specs=in_specs, out_specs=o_spec,
        out_shape=out_shape, compiler_params=_mosaic_params(2),
    )(*args)


def conv3x3_s1(x, p, *, relu=True):
    """3x3, stride 1, padding 1 conv (NHWC bf16), row-tiled direct-conv."""
    N, H, W, C = x.shape
    cout = p["wmat"].shape[1]
    Hp, Wp = H + 2, W + 2
    xp = jnp.pad(x, ((0, 0), (1, 1), (1, 1), (0, 0)))
    th = _row_tile(H)
    tn = cout if cout <= 512 else 512
    grid = (N, pl.cdiv(cout, tn), H // th)        # row tiles innermost

    return pl.pallas_call(
        functools.partial(_conv3x3_s1_kernel, th=th, W=W, cin=C, relu=relu),
        grid=grid,
        in_specs=[pl.BlockSpec((1, Hp, Wp, C), lambda n, j, r: (n, 0, 0, 0)),
                  pl.BlockSpec((9 * C, tn), lambda n, j, r: (0, j)),
                  pl.BlockSpec((1, tn), lambda n, j, r: (0, j))],
        out_specs=pl.BlockSpec((1, th, W, tn), lambda n, j, r: (n, r, 0, j)),
        out_shape=jax.ShapeDtypeStruct((N, H, W, cout), jnp.bfloat16),
        compiler_params=_mosaic_params(3),
    )(xp, p["wmat"], p["bias"])


def _fused_fits(H, W, cio, cmid):
    """Conservative VMEM estimate for the fused bottleneck path."""
    hw = H * W
    need = (3 * hw * cio * 2                         # x block (x2 buf) + out
            + (H + 2) * (W + 2) * cmid * 2           # padded mid scratch
            + hw * 9 * cmid * 2                      # in-VMEM im2col LHS
            + 2 * hw * cmid * 4 + hw * cio * 4       # f32 intermediates
            + 2 * (cio * cmid + 9 * cmid * cmid + cmid * cio) * 2)  # weights
    return need <= (_VMEM_LIMIT * 3) // 5


def bottleneck_fused(x, blk):
    """One pallas_call for a whole identity bottleneck block."""
    N, H, W, C = x.shape
    cmid = blk["c1"]["wmat"].shape[1]
    c1, c2, c3 = blk["c1"], blk["c2"], blk["c3"]
    kern = functools.partial(_bottleneck_id_kernel, H=H, W=W, cmid=cmid)
    return pl.pallas_call(
        kern,
        grid=(N,),
        in_specs=[pl.BlockSpec((1, H, W, C), lambda n: (n, 0, 0, 0)),
                  pl.BlockSpec(c1["wmat"].shape, lambda n: (0, 0)),
                  pl.BlockSpec(c1["bias"].shape, lambda n: (0, 0)),
                  pl.BlockSpec(c2["wmat"].shape, lambda n: (0, 0)),
                  pl.BlockSpec(c2["bias"].shape, lambda n: (0, 0)),
                  pl.BlockSpec(c3["wmat"].shape, lambda n: (0, 0)),
                  pl.BlockSpec(c3["bias"].shape, lambda n: (0, 0))],
        out_specs=pl.BlockSpec((1, H, W, C), lambda n: (n, 0, 0, 0)),
        out_shape=jax.ShapeDtypeStruct((N, H, W, C), jnp.bfloat16),
        scratch_shapes=[pltpu.VMEM((H + 2, W + 2, cmid), jnp.bfloat16)],
        compiler_params=_mosaic_params(1),
    )(x, c1["wmat"], c1["bias"], c2["wmat"], c2["bias"], c3["wmat"], c3["bias"])


def _im2col_nhwc(x, kh, kw, stride, padding):
    """x: (N,H,W,C) -> (N*Ho*Wo, kh*kw*C); columns ordered (kh, kw, C)."""
    N, H, W, C = x.shape
    xp = jnp.pad(x, ((0, 0), (padding, padding), (padding, padding), (0, 0)))
    Hp, Wp = H + 2 * padding, W + 2 * padding
    Ho = (Hp - kh) // stride + 1
    Wo = (Wp - kw) // stride + 1
    cols = []
    for i in range(kh):
        for j in range(kw):
            cols.append(xp[:, i:i + (Ho - 1) * stride + 1:stride,
                            j:j + (Wo - 1) * stride + 1:stride, :])
    p = jnp.stack(cols, axis=3)                        # (N, Ho, Wo, kh*kw, C)
    return p.reshape(N * Ho * Wo, kh * kw * C), Ho, Wo


def conv_bn(x, p, *, relu=True, residual=None):
    """Folded conv+BN on NHWC bf16 activations, fused bias/residual/relu."""
    kh, kw, stride, padding = p["kh"], p["kw"], p["stride"], p["padding"]
    N, H, W, C = x.shape
    cout = p["wmat"].shape[1]

    if kh == 1 and kw == 1:
        # TODO(synk): the stride-2 subsample is an XLA strided slice; folding
        # it into the matmul's BlockSpec/index_map is not done.
        xs = x[:, ::stride, ::stride, :] if stride > 1 else x
        Ho, Wo = xs.shape[1], xs.shape[2]
        a = xs.reshape(N * Ho * Wo, C)
        res = residual.reshape(N * Ho * Wo, cout) if residual is not None else None
        out = matmul_bias(a, p["wmat"], p["bias"], relu=relu, residual=res)
        return out.reshape(N, Ho, Wo, cout)

    if kh == 3 and kw == 3 and stride == 1 and padding == 1 and residual is None:
        return conv3x3_s1(x, p, relu=relu)

    # TODO(synk): the 7x7 stem and the 3 stride-2 3x3 convs still build their
    # im2col matrix at the XLA level (halo/space-to-depth kernel not done).
    a, Ho, Wo = _im2col_nhwc(x, kh, kw, stride, padding)
    res = residual.reshape(N * Ho * Wo, cout) if residual is not None else None
    out = matmul_bias(a, p["wmat"], p["bias"], relu=relu, residual=res)
    return out.reshape(N, Ho, Wo, cout)


def pool_and_heads(x_nhwc, hp, bg_thresh):
    """Fused avg-pool + ThresholdLinear main head + aux head."""
    N, H, W, C = x_nhwc.shape
    xr = x_nhwc.reshape(N, H * W, C)
    Np = hp["w"].shape[1]
    kern = functools.partial(_pool_heads_kernel, bg_thresh=bg_thresh,
                             inv_hw=1.0 / float(H * W))
    out = pl.pallas_call(
        kern, grid=(1,),
        in_specs=[pl.BlockSpec((N, H * W, C), lambda i: (0, 0, 0)),
                  pl.BlockSpec((C, Np), lambda i: (0, 0)),
                  pl.BlockSpec((1, Np), lambda i: (0, 0))],
        out_specs=pl.BlockSpec((N, Np), lambda i: (0, 0)),
        out_shape=jax.ShapeDtypeStruct((N, Np), jnp.float32),
        compiler_params=_mosaic_params(1),
    )(xr, hp["w"], hp["b"])
    main = out[:, :hp["n_main"]]
    aux = out[:, hp["n_main"]:hp["n_main"] + hp["n_aux"]]
    return main, aux


# ----------------------------------------------------------------------------
# Parameter init (synthetic, deterministic) + one-time BN folding / padding
# ----------------------------------------------------------------------------
def _conv_w(key, cout, cin, kh, kw):
    fan_in = cin * kh * kw
    return jax.random.normal(key, (cout, cin, kh, kw), jnp.float32) * jnp.sqrt(2.0 / fan_in)


def _bn_p(key, c):
    kg, kb = jax.random.split(key)
    return {"gamma": 1.0 + 0.1 * jax.random.normal(kg, (c,), jnp.float32),
            "beta": 0.1 * jax.random.normal(kb, (c,), jnp.float32),
            "mean": jnp.zeros((c,), jnp.float32),
            "var": jnp.ones((c,), jnp.float32)}


def init_resnet50_params(key):
    keys = iter(jax.random.split(key, 512))
    params = {"conv1": _conv_w(next(keys), 64, 3, 7, 7), "bn1": _bn_p(next(keys), 64)}
    layer_cfg = [(64, 3, 1), (128, 4, 2), (256, 6, 2), (512, 3, 2)]  # resnet50
    in_c = 64
    layers = []
    for planes, n_blocks, stride in layer_cfg:
        blocks = []
        for bidx in range(n_blocks):
            s = stride if bidx == 0 else 1
            out_c = planes * 4
            blk = {"stride": s,
                   "conv1": _conv_w(next(keys), planes, in_c, 1, 1),
                   "bn1": _bn_p(next(keys), planes),
                   "conv2": _conv_w(next(keys), planes, planes, 3, 3),
                   "bn2": _bn_p(next(keys), planes),
                   "conv3": _conv_w(next(keys), out_c, planes, 1, 1),
                   "bn3": _bn_p(next(keys), out_c)}
            if s != 1 or in_c != out_c:
                blk["down_conv"] = _conv_w(next(keys), out_c, in_c, 1, 1)
                blk["down_bn"] = _bn_p(next(keys), out_c)
            blocks.append(blk)
            in_c = out_c
        layers.append(blocks)
    params["layers"] = layers
    return params


def _fold_conv_bn(w, bn, stride, padding, *, cin_eff, eps=1e-5):
    """Fold eval-mode BN into the conv and lane-pad channels.

    Input channels are zero-padded to `cin_eff` (the producer's padded width)
    and output channels to a multiple of 128 lanes; padded channels carry
    exactly 0 through relu/maxpool so the math is unchanged."""
    cout, cin, kh, kw = w.shape
    scale = bn["gamma"] / jnp.sqrt(bn["var"] + eps)
    w_f = w * scale[:, None, None, None]
    bias = bn["beta"] - bn["mean"] * scale
    cout_pad = _round_up(cout, _LANE)
    if cin_eff > cin:
        w_f = jnp.pad(w_f, ((0, 0), (0, cin_eff - cin), (0, 0), (0, 0)))
    if cout_pad > cout:
        w_f = jnp.pad(w_f, ((0, cout_pad - cout), (0, 0), (0, 0), (0, 0)))
        bias = jnp.pad(bias, (0, cout_pad - cout))
    wmat = jnp.transpose(w_f, (2, 3, 1, 0)).reshape(kh * kw * cin_eff, cout_pad)
    return {"wmat": wmat.astype(jnp.bfloat16),
            "bias": bias.reshape(1, cout_pad).astype(jnp.float32),
            "kh": kh, "kw": kw, "stride": stride, "padding": padding}


def fold_backbone_params(raw, eps=1e-5):
    folded = {"stem": _fold_conv_bn(raw["conv1"], raw["bn1"], 2, 3, cin_eff=3, eps=eps)}
    c_in = folded["stem"]["wmat"].shape[1]       # 64 -> padded to 128
    layers = []
    for blocks in raw["layers"]:
        fblocks = []
        for blk in blocks:
            s = blk["stride"]
            fb = {"c1": _fold_conv_bn(blk["conv1"], blk["bn1"], 1, 0,
                                      cin_eff=c_in, eps=eps)}
            cmid = fb["c1"]["wmat"].shape[1]
            fb["c2"] = _fold_conv_bn(blk["conv2"], blk["bn2"], s, 1,
                                     cin_eff=cmid, eps=eps)
            cmid2 = fb["c2"]["wmat"].shape[1]
            fb["c3"] = _fold_conv_bn(blk["conv3"], blk["bn3"], 1, 0,
                                     cin_eff=cmid2, eps=eps)
            if "down_conv" in blk:
                fb["down"] = _fold_conv_bn(blk["down_conv"], blk["down_bn"], s, 0,
                                           cin_eff=c_in, eps=eps)
            fblocks.append(fb)
            c_in = fb["c3"]["wmat"].shape[1]
        layers.append(fblocks)
    folded["layers"] = layers
    return folded


def prepare_heads(hp):
    """Concatenate main+aux heads into one lane-padded (D, 128k) f32 weight."""
    w = jnp.concatenate([hp["main_w"], hp["aux_w"]], axis=1)
    b = jnp.concatenate([hp["main_b"], hp["aux_b"]], axis=1)
    n = w.shape[1]
    n_pad = _round_up(n, _LANE)
    w = jnp.pad(w, ((0, 0), (0, n_pad - n))).astype(jnp.float32)
    b = jnp.pad(b, ((0, 0), (0, n_pad - n))).astype(jnp.float32)
    return {"w": w, "b": b,
            "n_main": hp["main_w"].shape[1], "n_aux": hp["aux_w"].shape[1]}


# ----------------------------------------------------------------------------
# Forward pass
# ----------------------------------------------------------------------------
def bottleneck(x, blk):
    N, H, W, C = x.shape
    cmid = blk["c1"]["wmat"].shape[1]
    if ("down" not in blk and blk["c2"]["stride"] == 1
            and _fused_fits(H, W, C, cmid)):
        return bottleneck_fused(x, blk)
    # Per-conv path (transition blocks / VMEM-guard fallback).
    identity = conv_bn(x, blk["down"], relu=False) if "down" in blk else x
    out = conv_bn(x, blk["c1"], relu=True)
    out = conv_bn(out, blk["c2"], relu=True)
    out = conv_bn(out, blk["c3"], relu=False, residual=identity)
    return out


def _maxpool_3x3_s2_p1(x):
    # TODO(synk): pooling stays as a single XLA reduce_window rather than a
    # Pallas kernel fused with the stem output.
    neg_inf = jnp.asarray(-jnp.inf, dtype=x.dtype)
    return lax.reduce_window(
        x, neg_inf, lax.max,
        window_dimensions=(1, 3, 3, 1),
        window_strides=(1, 2, 2, 1),
        padding=((0, 0), (1, 1), (1, 1), (0, 0)))


def backbone_forward(x_nchw, params):
    # single relayout to NHWC bf16; activations stay NHWC bf16 from here on
    x = jnp.transpose(x_nchw, (0, 2, 3, 1)).astype(jnp.bfloat16)
    x = conv_bn(x, params["stem"], relu=True)
    x = _maxpool_3x3_s2_p1(x)                       # MaxPool2d(3, 2, 1)
    for layer in params["layers"]:
        for blk in layer:
            x = bottleneck(x, blk)
    return x                                        # (N, Hf, Wf, 2048) bf16


def bg_splitting_forward(x, backbone_params, head_params, fixed_bg_threshold):
    feat_map = backbone_forward(x, backbone_params)
    # AdaptiveAvgPool2d((1,1)) + flatten + ThresholdLinear + aux head (fused)
    return pool_and_heads(feat_map, head_params, fixed_bg_threshold)


# ----------------------------------------------------------------------------
if __name__ == "__main__":
    num_main_classes = 5     # main head outputs num_main_classes + 1 (background)
    num_aux_classes = 3
    fixed_bg_threshold = 0.25

    key = jax.random.PRNGKey(0)
    k_bb, k_head, k_x = jax.random.split(key, 3)

    raw_backbone = init_resnet50_params(k_bb)
    backbone_params = fold_backbone_params(raw_backbone)   # BN folded once, bf16

    D = 2048                 # backbone.fc.in_features for resnet50
    kh1, kh2, kh3, kh4 = jax.random.split(k_head, 4)
    raw_heads = {
        "main_w": jax.random.normal(kh1, (D, num_main_classes + 1), jnp.float32) / jnp.sqrt(D),
        "main_b": 0.01 * jax.random.normal(kh2, (1, num_main_classes + 1), jnp.float32),
        "aux_w": jax.random.normal(kh3, (D, num_aux_classes), jnp.float32) / jnp.sqrt(D),
        "aux_b": 0.01 * jax.random.normal(kh4, (1, num_aux_classes), jnp.float32),
    }
    head_params = prepare_heads(raw_heads)

    x = jax.random.normal(k_x, (2, 3, 32, 32), jnp.float32)   # NCHW image input

    main_logits, aux_logits = bg_splitting_forward(
        x, backbone_params, head_params, fixed_bg_threshold)
    jax.block_until_ready((main_logits, aux_logits))

    assert main_logits.shape == (2, num_main_classes + 1)
    assert aux_logits.shape == (2, num_aux_classes)
    assert bool(jnp.all(main_logits[:, 0] == fixed_bg_threshold))
    print("KERNEL_OK")
</pallas_src>

<mosaic_0001>
module attributes {stable_mosaic.version = 11 : i64} {
  func.func @_mm_bias_kernel(%arg0: i32, %arg1: i32, %arg2: memref<256x147xbf16, #tpu.memory_space<vmem>>, %arg3: memref<147x128xbf16, #tpu.memory_space<vmem>>, %arg4: memref<1x128xf32, #tpu.memory_space<vmem>>, %arg5: memref<256x128xbf16, #tpu.memory_space<vmem>>) attributes {dimension_semantics = [#tpu.dimension_semantics<parallel>, #tpu.dimension_semantics<parallel>], iteration_bounds = array<i64: 1, 2>, scalar_prefetch = 0 : i64, scratch_operands = 0 : i64, tpu.core_type = #tpu.core_type<tc>, window_params = [{transform_indices = @transform_0, window_bounds = array<i64: 256, 147>}, {transform_indices = @transform_1, window_bounds = array<i64: 147, 128>}, {transform_indices = @transform_2, window_bounds = array<i64: 1, 128>}, {transform_indices = @transform_3, window_bounds = array<i64: 256, 128>}]} {
    %c0 = arith.constant 0 : index
    %c0_0 = arith.constant 0 : index
    %0 = vector.load %arg2[%c0, %c0_0] : memref<256x147xbf16, #tpu.memory_space<vmem>>, vector<256x147xbf16>
    %c0_1 = arith.constant 0 : index
    %c0_2 = arith.constant 0 : index
    %1 = vector.load %arg3[%c0_1, %c0_2] : memref<147x128xbf16, #tpu.memory_space<vmem>>, vector<147x128xbf16>
    %cst = arith.constant dense<0.000000e+00> : vector<256x128xf32>
    %2 = tpu.matmul %0, %1, %cst {dimension_numbers = #tpu.dot_dimension_numbers<[1], [0], [0], [1], [0, 0, 1, 1], [], []>} : vector<256x147xbf16>, vector<147x128xbf16>, vector<256x128xf32> -> vector<256x128xf32>
    %c0_3 = arith.constant 0 : index
    %c0_4 = arith.constant 0 : index
    %3 = vector.load %arg4[%c0_3, %c0_4] : memref<1x128xf32, #tpu.memory_space<vmem>>, vector<1x128xf32>
    %4 = vector.broadcast %3 : vector<1x128xf32> to vector<256x128xf32>
    %5 = arith.addf %2, %4 : vector<256x128xf32>
    %cst_5 = arith.constant 0.000000e+00 : f32
    %6 = vector.broadcast %cst_5 : f32 to vector<256x128xf32>
    %7 = arith.maximumf %5, %6 : vector<256x128xf32>
    %8 = arith.truncf %7 : vector<256x128xf32> to vector<256x128xbf16>
    %c0_6 = arith.constant 0 : index
    %c0_7 = arith.constant 0 : index
    %9 = vector.load %arg5[%c0_6, %c0_7] : memref<256x128xbf16, #tpu.memory_space<vmem>>, vector<256x128xbf16>
    tpu.vector_store %arg5[%c0_6, %c0_7], %8 {strides = array<i32>} : memref<256x128xbf16, #tpu.memory_space<vmem>>, vector<256x128xbf16>,
    return
  }
  func.func @transform_0(%arg0: i32, %arg1: i32) -> (i32, i32) {
    %c0_i32 = arith.constant 0 : i32
    %c0_i32_0 = arith.constant 0 : i32
    return %arg1, %c0_i32 : i32, i32
  }
  func.func @transform_1(%arg0: i32, %arg1: i32) -> (i32, i32) {
    %c0_i32 = arith.constant 0 : i32
    %c0_i32_0 = arith.constant 0 : i32
    return %c0_i32, %arg0 : i32, i32
  }
  func.func @transform_2(%arg0: i32, %arg1: i32) -> (i32, i32) {
    %c0_i32 = arith.constant 0 : i32
    %c0_i32_0 = arith.constant 0 : i32
    return %c0_i32, %arg0 : i32, i32
  }
  func.func @transform_3(%arg0: i32, %arg1: i32) -> (i32, i32) {
    %c0_i32 = arith.constant 0 : i32
    return %arg1, %arg0 : i32, i32
  }
}

</mosaic_0001>

<llo_original>
// kernel: tpu_custom_call.1
$region0: #{tpu_custom_call.1}
  #allocation0 [shape = 'u32[]', space=smem, size = 0x4, offset = 0x4, fixed_abs, tag = 'smem constant byte address 0x4 - core index']
  #allocation1 [shape = 'u32[144,128]{1,0:T(1,128)}', space=vmem, size = 0x12000, scoped, tag = 'internal scratch']
  %s0 = inlined_call_operand.vmem [shape: bf16[512,147], index: 0, kind: input, shape index: {}]
  %s1 = inlined_call_operand.vmem [shape: bf16[147,128], index: 1, kind: input, shape index: {}]
  %s2 = inlined_call_operand.vmem [shape: f32[1,128], index: 2, kind: input, shape index: {}]
  %s3 = inlined_call_operand.hbm [shape: bf16[512,128], index: 3, kind: output, shape index: {}]
  %s4 = sld [smem:[#allocation0]]
  $region45: #{tpu_custom_call.1} parent=0
    _
  %s6 = ssub.s32 1, %s4
  %s7 = scalar_select 0, %s6, %s4
  $region1: #{tpu_custom_call.1} parent=0
    #allocation2 [shape = 'u8[131072]{0}', space=vmem, size = 0x20000, scoped, tag = 'output window, operand 0']
    #allocation3 [shape = 's32[2]{0}', space=sflag, size = 0x8, scoped, tag = 'scoped memory for tpu_custom_call.1']
    %8 = vsyncpa [#allocation3], 0
    %s9 = scalar_lea.sflag [#allocation3], 1
    %10 = vsyncpa %s9, 0
    loop: start=0, step=1, limit=4
    $region2: #{tpu_custom_call.1} parent=1 // loop_pre_header
      _
    $region3: #{tpu_custom_call.1} parent=1 // loop_header
      %s12 = sphi 0, %s16
      %p13 = scmp.ge.s32.totalorder %s12, 4
      %s19 = sphi 0, %s31
      %s20 = sphi 0, %s27
      %s21 = sphi 0, %s19
      %s22 = sphi 0, %s20
      %s23 = sphi 0, %s21
      %s24 = sphi 0, %s22
      %s34 = sphi 0, %s36
      %s37 = sphi 0, %s34
      %s38 = sphi 0, %s37
      %s54 = sphi 0, %s38
      %s60 = sphi 0, %s62
      %s63 = sphi 0, %s60
      %s64 = sphi 0, %s63
      %s80 = sphi 0, %s64
      %s86 = sphi 0, %s88
      %s89 = sphi 0, %s86
      %s90 = sphi 0, %s89
      %s106 = sphi 0, %s90
      %s114 = sphi 0, %s116
      %s117 = sphi 0, %s114
      %s118 = sphi 0, %s117
      %s134 = sphi 0, %s118
    $region4: #{tpu_custom_call.1} parent=1 // loop_header_branch
      %15 = sbr.rel (%p13) target = $region8
    $region5: #{tpu_custom_call.1} parent=1 // loop_body
      %s17 = ssub.s32 %s12, 1
      %s18 = ssub.s32 %s12, 2
      %s25 = sadd.s32 1, %s20
      %p26 = scmp.ge.s32.totalorder %s25, 2
      %s27 = scalar_select %p26, 0, %s25
      %s28 = sadd.s32 1, %s19
      %s29 = scalar_select %p26, %s28, %s19
      %p30 = scmp.ge.s32.totalorder %s29, 1
      %s31 = scalar_select %p30, 0, %s29
      %s32 = ssub.s32 %s20, %s27
      %p33 = scmp.eq.s32.totalorder %s32, 0
      %s35 = sadd.s32 %s34, 1
      %s36 = scalar_select %p33, %s34, %s35
      %p39 = pneg %p33
      %p40 = scmp.eq.s32.totalorder %s12, 1
      %p41 = por %p39, %p40
      %p42 = scmp.ne.s32.totalorder %s34, %s37
      %p43 = scmp.eq.s32.totalorder %s12, 0
      %p44 = por %p42, %p43
      %p45 = scmp.ne.s32.totalorder %s34, %s37
      %p46 = scmp.eq.s32.totalorder %s17, 1
      %p47 = por %p45, %p46
      %p48 = scmp.ne.s32.totalorder %s37, %s38
      %p49 = scmp.eq.s32.totalorder %s17, 0
      %p50 = por %p48, %p49
      %p51 = scmp.ne.s32.totalorder %s37, %s38
      %p52 = scmp.eq.s32.totalorder %s18, 1
      %p53 = por %p51, %p52
      %p55 = scmp.ne.s32.totalorder %s38, %s54
      %p56 = scmp.eq.s32.totalorder %s18, 0
      %p57 = por %p55, %p56
      %s58 = ssub.s32 %s19, %s31
      %p59 = scmp.eq.s32.totalorder %s58, 0
      %s61 = sadd.s32 %s60, 1
      %s62 = scalar_select %p59, %s60, %s61
      %p65 = pneg %p59
      %p66 = scmp.eq.s32.totalorder %s12, 1
      %p67 = por %p65, %p66
      %p68 = scmp.ne.s32.totalorder %s60, %s63
      %p69 = scmp.eq.s32.totalorder %s12, 0
      %p70 = por %p68, %p69
      %p71 = scmp.ne.s32.totalorder %s60, %s63
      %p72 = scmp.eq.s32.totalorder %s17, 1
      %p73 = por %p71, %p72
      %p74 = scmp.ne.s32.totalorder %s63, %s64
      %p75 = scmp.eq.s32.totalorder %s17, 0
      %p76 = por %p74, %p75
      %p77 = scmp.ne.s32.totalorder %s63, %s64
      %p78 = scmp.eq.s32.totalorder %s18, 1
      %p79 = por %p77, %p78
      %p81 = scmp.ne.s32.totalorder %s64, %s80
      %p82 = scmp.eq.s32.totalorder %s18, 0
      %p83 = por %p81, %p82
      %s84 = ssub.s32 %s19, %s31
      %p85 = scmp.eq.s32.totalorder %s84, 0
      %s87 = sadd.s32 %s86, 1
      %s88 = scalar_select %p85, %s86, %s87
      %p91 = pneg %p85
      %p92 = scmp.eq.s32.totalorder %s12, 1
      %p93 = por %p91, %p92
      %p94 = scmp.ne.s32.totalorder %s86, %s89
      %p95 = scmp.eq.s32.totalorder %s12, 0
      %p96 = por %p94, %p95
      %p97 = scmp.ne.s32.totalorder %s86, %s89
      %p98 = scmp.eq.s32.totalorder %s17, 1
      %p99 = por %p97, %p98
      %p100 = scmp.ne.s32.totalorder %s89, %s90
      %p101 = scmp.eq.s32.totalorder %s17, 0
      %p102 = por %p100, %p101
      %p103 = scmp.ne.s32.totalorder %s89, %s90
      %p104 = scmp.eq.s32.totalorder %s18, 1
      %p105 = por %p103, %p104
      %p107 = scmp.ne.s32.totalorder %s90, %s106
      %p108 = scmp.eq.s32.totalorder %s18, 0
      %p109 = por %p107, %p108
      %s110 = ssub.s32 %s20, %s27
      %s111 = ssub.s32 %s19, %s31
      %s112 = sor.u32 %s110, %s111
      %p113 = scmp.eq.s32.totalorder %s112, 0
      %s115 = sadd.s32 %s114, 1
      %s116 = scalar_select %p113, %s114, %s115
      %p119 = pneg %p113
      %p120 = scmp.eq.s32.totalorder %s12, 1
      %p121 = por %p119, %p120
      %p122 = scmp.ne.s32.totalorder %s114, %s117
      %p123 = scmp.eq.s32.totalorder %s12, 0
      %p124 = por %p122, %p123
      %p125 = scmp.ne.s32.totalorder %s114, %s117
      %p126 = scmp.eq.s32.totalorder %s17, 1
      %p127 = por %p125, %p126
      %p128 = scmp.ne.s32.totalorder %s117, %s118
      %p129 = scmp.eq.s32.totalorder %s17, 0
      %p130 = por %p128, %p129
      %p131 = scmp.ne.s32.totalorder %s117, %s118
      %p132 = scmp.eq.s32.totalorder %s18, 1
      %p133 = por %p131, %p132
      %p135 = scmp.ne.s32.totalorder %s118, %s134
      %p136 = scmp.eq.s32.totalorder %s18, 0
      %p137 = por %p135, %p136
      %p138 = scmp.le.s32.totalorder 1, %s12
      %p139 = scmp.lt.s32.totalorder %s12, 3
      %p140 = pnand %p138, %p139
      %p141 = pneg %p140
      // Predicated region
      $region9: #{tpu_custom_call.1} parent=5 // pred_check
        _
      $region10: #{tpu_custom_call.1} parent=5 // pred_check_branch
        %143 = sbr.rel (%p140) target = $region12
      $region11: #{tpu_custom_call.1} parent=5 // pred_region
        %s144 = ssub.s32 %s12, 1
        // Predicated region
        $region13: #{tpu_custom_call.1} parent=11 // pred_check
          %p145 = pneg %p76
        $region14: #{tpu_custom_call.1} parent=11 // pred_check_branch
          %147 = sbr.rel (%p145) target = $region16
        $region15: #{tpu_custom_call.1} parent=11 // pred_region
          %p148 = scmp.lt.s32.totalorder %s21, 0
          %s149 = scalar_select %p148, %s21, 0
          %s150 = smul.addr %s149, 4
          %s151 = scalar_lea.vmem %s1, %s150
        $region16: #{tpu_custom_call.1} parent=11 // pred_fallthru
          _
        // Predicated region
        $region17: #{tpu_custom_call.1} parent=11 // pred_check
          %p152 = pneg %p102
        $region18: #{tpu_custom_call.1} parent=11 // pred_check_branch
          %154 = sbr.rel (%p152) target = $region20
        $region19: #{tpu_custom_call.1} parent=11 // pred_region
          %p155 = scmp.lt.s32.totalorder %s21, 0
          %s156 = scalar_select %p155, %s21, 0
          %s157 = scalar_lea.vmem %s2, %s156
        $region20: #{tpu_custom_call.1} parent=11 // pred_fallthru
          _
      $region12: #{tpu_custom_call.1} parent=5 // pred_fallthru
        _
      %p158 = scmp.lt.s32.totalorder %s12, 2
      // Predicated region
      $region21: #{tpu_custom_call.1} parent=5 // pred_check
        %p159 = pneg %p158
      $region22: #{tpu_custom_call.1} parent=5 // pred_check_branch
        %161 = sbr.rel (%p159) target = $region24
      $region23: #{tpu_custom_call.1} parent=5 // pred_region
        // Predicated region
        $region25: #{tpu_custom_call.1} parent=23 // pred_check
          %p162 = pneg %p44
        $region26: #{tpu_custom_call.1} parent=23 // pred_check_branch
          %164 = sbr.rel (%p162) target = $region28
        $region27: #{tpu_custom_call.1} parent=23 // pred_region
          %s165 = smul.u32 32, %s20
          %p166 = scmp.lt.s32.totalorder %s165, 63
          %s167 = scalar_select %p166, %s165, 63
          %s168 = smul.addr %s167, 2
          %s169 = smul.addr %s168, 4
          %s170 = scalar_lea.vmem %s0, %s169
          %s171 = smul.u32 32, %s20
        $region28: #{tpu_custom_call.1} parent=23 // pred_fallthru
          _
      $region24: #{tpu_custom_call.1} parent=5 // pred_fallthru
        _
      %p172 = scmp.le.s32.totalorder 1, %s12
      %p173 = scmp.lt.s32.totalorder %s12, 3
      %p174 = pnand %p172, %p173
      %p175 = pneg %p174
      // Predicated region
      $region29: #{tpu_custom_call.1} parent=5 // pred_check
        _
      $region30: #{tpu_custom_call.1} parent=5 // pred_check_branch
        %177 = sbr.rel (%p174) target = $region32
      $region31: #{tpu_custom_call.1} parent=5 // pred_region
        %s178 = ssub.s32 %s12, 1
        %s179 = smul.u32 32, %s22
        %p180 = scmp.lt.s32.totalorder %s179, 63
        %s181 = scalar_select %p180, %s179, 63
        %s182 = smul.addr %s181, 2
        %s183 = smul.addr %s182, 4
        %s184 = scalar_lea.vmem %s0, %s183
        %p185 = pneg %p50
        %p186 = pneg %p47
        %p187 = scmp.lt.s32.totalorder %s21, 0
        %s188 = scalar_select %p187, %s21, 0
        %s189 = smul.addr %s188, 4
        %s190 = scalar_lea.vmem %s1, %s189
        %p191 = pneg %p76
        %p192 = pneg %p73
        %p193 = scmp.lt.s32.totalorder %s21, 0
        %s194 = scalar_select %p193, %s21, 0
        %s195 = scalar_lea.vmem %s2, %s194
        %p196 = pneg %p102
        %p197 = pneg %p99
        %p198 = pneg %p130
        %p199 = pneg %p127
        %s200 = sand.u32 %s117, 1
        %s201 = scalar_lea.sflag [#allocation3], %s200
        %s202 = sand.u32 %s117, 1
        %s203 = smul.addr %s202, 128
        %s204 = scalar_lea.vmem [#allocation2], %s203
        %s205 = smul.u32 32, %s22
        %p206 = scmp.lt.s32.totalorder %s205, 63
        %s207 = scalar_select %p206, %s205, 63
        %s208 = smul.addr %s207, 2
        %s209 = smul.addr %s208, 4
        %s210 = scalar_lea.vmem %s0, %s209
        %s211 = smul.u32 32, %s22
        %p212 = scmp.lt.s32.totalorder %s21, 0
        %s213 = scalar_select %p212, %s21, 0
        %s214 = smul.addr %s213, 4
        %s215 = scalar_lea.vmem %s1, %s214
        %p216 = scmp.lt.s32.totalorder %s21, 0
        %s217 = scalar_select %p216, %s21, 0
        %s218 = scalar_lea.vmem %s2, %s217
        %s219 = smul.u32 32, %s22
        %v221 = vld [vmem:[%s210] sm:$0xff]
        %v222 = vld [vmem:[%s210 + $0x8] sm:$0xff]
        %v223 = vld [vmem:[%s210 + $0x10] sm:$0xff]
        %v224 = vld [vmem:[%s210 + $0x18] sm:$0xff]
        %v225 = vld [vmem:[%s210 + $0x20] sm:$0xff]
        %v226 = vld [vmem:[%s210 + $0x28] sm:$0xff]
        %v227 = vld [vmem:[%s210 + $0x30] sm:$0xff]
        %v228 = vld [vmem:[%s210 + $0x38] sm:$0xff]
        %v229 = vld [vmem:[%s210 + $0x40] sm:$0xff]
        %v230 = vld [vmem:[%s210 + $0x48] sm:$0xff]
        %v231 = vld [vmem:[%s210 + $0x50] sm:$0xff]
        %v232 = vld [vmem:[%s210 + $0x58] sm:$0xff]
        %v233 = vld [vmem:[%s210 + $0x60] sm:$0xff]
        %v234 = vld [vmem:[%s210 + $0x68] sm:$0xff]
        %v235 = vld [vmem:[%s210 + $0x70] sm:$0xff]
        %v236 = vld [vmem:[%s210 + $0x78] sm:$0xff]
        %v237 = vld [vmem:[%s210 + $0x80] sm:$0xff]
        %v238 = vld [vmem:[%s210 + $0x88] sm:$0xff]
        %v239 = vld [vmem:[%s210 + $0x90] sm:$0xff]
        %v240 = vld [vmem:[%s210 + $0x98] sm:$0xff]
        %v241 = vld [vmem:[%s210 + $0xa0] sm:$0xff]
        %v242 = vld [vmem:[%s210 + $0xa8] sm:$0xff]
        %v243 = vld [vmem:[%s210 + $0xb0] sm:$0xff]
        %v244 = vld [vmem:[%s210 + $0xb8] sm:$0xff]
        %v245 = vld [vmem:[%s210 + $0xc0] sm:$0xff]
        %v246 = vld [vmem:[%s210 + $0xc8] sm:$0xff]
        %v247 = vld [vmem:[%s210 + $0xd0] sm:$0xff]
        %v248 = vld [vmem:[%s210 + $0xd8] sm:$0xff]
        %v249 = vld [vmem:[%s210 + $0xe0] sm:$0xff]
        %v250 = vld [vmem:[%s210 + $0xe8] sm:$0xff]
        %v251 = vld [vmem:[%s210 + $0xf0] sm:$0xff]
        %v252 = vld [vmem:[%s210 + $0xf8] sm:$0xff]
        %v253 = vld [vmem:[%s215] sm:$0xf]
        %v254 = vld [vmem:[%s215 + $0x4] sm:$0xf]
        %v255 = vld [vmem:[%s215 + $0x8] sm:$0xf]
        %v256 = vld [vmem:[%s215 + $0xc] sm:$0xf]
        %v257 = vld [vmem:[%s215 + $0x10] sm:$0xf]
        %v258 = vld [vmem:[%s215 + $0x14] sm:$0xf]
        %v259 = vld [vmem:[%s215 + $0x18] sm:$0xf]
        %v260 = vld [vmem:[%s215 + $0x1c] sm:$0xf]
        %v261 = vld [vmem:[%s215 + $0x20] sm:$0xf]
        %v262 = vld [vmem:[%s215 + $0x24] sm:$0xf]
        %v263 = vld [vmem:[%s215 + $0x28] sm:$0xf]
        %v264 = vld [vmem:[%s215 + $0x2c] sm:$0xf]
        %v265 = vld [vmem:[%s215 + $0x30] sm:$0xf]
        %v266 = vld [vmem:[%s215 + $0x34] sm:$0xf]
        %v267 = vld [vmem:[%s215 + $0x38] sm:$0xf]
        %v268 = vld [vmem:[%s215 + $0x3c] sm:$0xf]
        %v269 = vld [vmem:[%s215 + $0x40] sm:$0xf]
        %v270 = vld [vmem:[%s215 + $0x44] sm:$0xf]
        %v271 = vld [vmem:[%s215 + $0x48] sm:$0x3]
        %v272 = vld [vmem:[%s218] sm:$0x1]
        %v274 = vlaneseq
        %v275 = vshrl.u32 %v274, 7
        %v276 = vsub.s32 0, %v275
        %v277 = vrot.slane %v272, %v276
        %v311 = vunpack.c.l.b16 %v221
        %v312 = vunpack.c.h.b16 %v221
        %v313 = vunpack.c.l.b16 %v222
        %v314 = vunpack.c.h.b16 %v222
        %v315 = vunpack.c.l.b16 %v223
        %v316 = vunpack.c.h.b16 %v223
        %v317 = vunpack.c.l.b16 %v224
        %v318 = vunpack.c.h.b16 %v224
        %v319 = vunpack.c.l.b16 %v225
        %v320 = vunpack.c.h.b16 %v225
        %v321 = vunpack.c.l.b16 %v226
        %v322 = vunpack.c.h.b16 %v226
        %v323 = vunpack.c.l.b16 %v227
        %v324 = vunpack.c.h.b16 %v227
        %v325 = vunpack.c.l.b16 %v228
        %v326 = vunpack.c.h.b16 %v228
        %v327 = vunpack.c.l.b16 %v229
        %v328 = vunpack.c.h.b16 %v229
        %v329 = vunpack.c.l.b16 %v230
        %v330 = vunpack.c.h.b16 %v230
        %v331 = vunpack.c.l.b16 %v231
        %v332 = vunpack.c.h.b16 %v231
        %v333 = vunpack.c.l.b16 %v232
        %v334 = vunpack.c.h.b16 %v232
        %v335 = vunpack.c.l.b16 %v233
        %v336 = vunpack.c.h.b16 %v233
        %v337 = vunpack.c.l.b16 %v234
        %v338 = vunpack.c.h.b16 %v234
        %v339 = vunpack.c.l.b16 %v235
        %v340 = vunpack.c.h.b16 %v235
        %v341 = vunpack.c.l.b16 %v236
        %v342 = vunpack.c.h.b16 %v236
        %v343 = vunpack.c.l.b16 %v237
        %v344 = vunpack.c.h.b16 %v237
        %v345 = vunpack.c.l.b16 %v238
        %v346 = vunpack.c.h.b16 %v238
        %v347 = vunpack.c.l.b16 %v239
        %v348 = vunpack.c.h.b16 %v239
        %v349 = vunpack.c.l.b16 %v240
        %v350 = vunpack.c.h.b16 %v240
        %v351 = vunpack.c.l.b16 %v241
        %v352 = vunpack.c.h.b16 %v241
        %v353 = vunpack.c.l.b16 %v242
        %v354 = vunpack.c.h.b16 %v242
        %v355 = vunpack.c.l.b16 %v243
        %v356 = vunpack.c.h.b16 %v243
        %v357 = vunpack.c.l.b16 %v244
        %v358 = vunpack.c.h.b16 %v244
        %v359 = vunpack.c.l.b16 %v245
        %v360 = vunpack.c.h.b16 %v245
        %v361 = vunpack.c.l.b16 %v246
        %v362 = vunpack.c.h.b16 %v246
        %v363 = vunpack.c.l.b16 %v247
        %v364 = vunpack.c.h.b16 %v247
        %v365 = vunpack.c.l.b16 %v248
        %v366 = vunpack.c.h.b16 %v248
        %v367 = vunpack.c.l.b16 %v249
        %v368 = vunpack.c.h.b16 %v249
        %v369 = vunpack.c.l.b16 %v250
        %v370 = vunpack.c.h.b16 %v250
        %v371 = vunpack.c.l.b16 %v251
        %v372 = vunpack.c.h.b16 %v251
        %v373 = vunpack.c.l.b16 %v252
        %v374 = vunpack.c.h.b16 %v252
        %v375 = vpack.c.b16 %v313, %v311
        %v376 = vpack.c.b16 %v314, %v312
        %v377 = vpack.c.b16 %v317, %v315
        %v378 = vpack.c.b16 %v318, %v316
        %v379 = vpack.c.b16 %v321, %v319
        %v380 = vpack.c.b16 %v322, %v320
        %v381 = vpack.c.b16 %v325, %v323
        %v382 = vpack.c.b16 %v326, %v324
        %v383 = vpack.c.b16 %v329, %v327
        %v384 = vpack.c.b16 %v330, %v328
        %v385 = vpack.c.b16 %v333, %v331
        %v386 = vpack.c.b16 %v334, %v332
        %v387 = vpack.c.b16 %v337, %v335
        %v388 = vpack.c.b16 %v338, %v336
        %v389 = vpack.c.b16 %v341, %v339
        %v390 = vpack.c.b16 %v342, %v340
        %v391 = vpack.c.b16 %v345, %v343
        %v392 = vpack.c.b16 %v346, %v344
        %v393 = vpack.c.b16 %v349, %v347
        %v394 = vpack.c.b16 %v350, %v348
        %v395 = vpack.c.b16 %v353, %v351
        %v396 = vpack.c.b16 %v354, %v352
        %v397 = vpack.c.b16 %v357, %v355
        %v398 = vpack.c.b16 %v358, %v356
        %v399 = vpack.c.b16 %v361, %v359
        %v400 = vpack.c.b16 %v362, %v360
        %v401 = vpack.c.b16 %v365, %v363
        %v402 = vpack.c.b16 %v366, %v364
        %v403 = vpack.c.b16 %v369, %v367
        %v404 = vpack.c.b16 %v370, %v368
        %v405 = vpack.c.b16 %v373, %v371
        %v406 = vpack.c.b16 %v374, %v372
        %v442 = vunpack.c.l.b16 %v253
        %v443 = vunpack.c.l.b16 %v254
        %v444 = vunpack.c.l.b16 %v255
        %v445 = vunpack.c.l.b16 %v256
        %v446 = vunpack.c.l.b16 %v257
        %v447 = vunpack.c.l.b16 %v258
        %v448 = vunpack.c.l.b16 %v259
        %v449 = vunpack.c.l.b16 %v260
        %v450 = vunpack.c.l.b16 %v261
        %v451 = vunpack.c.l.b16 %v262
        %v452 = vunpack.c.l.b16 %v263
        %v453 = vunpack.c.l.b16 %v264
        %v454 = vunpack.c.l.b16 %v265
        %v455 = vunpack.c.l.b16 %v266
        %v456 = vunpack.c.l.b16 %v267
        %v457 = vunpack.c.l.b16 %v268
        %v458 = vunpack.c.l.b16 %v269
        %v459 = vunpack.c.l.b16 %v270
        %v460 = vunpack.c.l.b16 %v271
        %v461 = vpack.c.b16 %v443, %v442
        %v462 = vpack.c.b16 %v445, %v444
        %v463 = vpack.c.b16 %v447, %v446
        %v464 = vpack.c.b16 %v449, %v448
        %v465 = vpack.c.b16 %v451, %v450
        %v466 = vpack.c.b16 %v453, %v452
        %v467 = vpack.c.b16 %v455, %v454
        %v468 = vpack.c.b16 %v457, %v456
        %v469 = vpack.c.b16 %v459, %v458
        %v470 = vpack.c.b16 %v460, %v460
        %vm480 = vcmask 154624
        %v482 = vsel %vm480, %v376, 0
        %v485 = vsel %vm480, %v378, 0
        %v488 = vsel %vm480, %v380, 0
        %v491 = vsel %vm480, %v382, 0
        %v494 = vsel %vm480, %v384, 0
        %v497 = vsel %vm480, %v386, 0
        %v500 = vsel %vm480, %v388, 0
        %v503 = vsel %vm480, %v390, 0
        %v506 = vsel %vm480, %v392, 0
        %v509 = vsel %vm480, %v394, 0
        %v512 = vsel %vm480, %v396, 0
        %v515 = vsel %vm480, %v398, 0
        %v518 = vsel %vm480, %v400, 0
        %v521 = vsel %vm480, %v402, 0
        %v524 = vsel %vm480, %v404, 0
        %v527 = vsel %vm480, %v406, 0
        %vm529 = vcmask 1040384
        %vm530 = vcmask 1041408
        %v531 = vsel %vm529, 4294967295, 65535
        %v532 = vsel %vm530, %v531, 0
        %v534 = vand.u32 %v470, %v532
        %536 = vmatprep.subr.bf16.mxu0 0
        %537 = vmatpush1.bf16.msra.mxu0 %v461
        %538 = vmatprep.subr.bf16.mxu0 0
        %539 = vmatpush1.bf16.msra.mxu0 %v462
        %540 = vmatprep.subr.bf16.mxu0 0
        %541 = vmatpush1.bf16.msra.mxu0 %v463
        %542 = vmatprep.subr.bf16.mxu0 0
        %543 = vmatpush1.bf16.msra.mxu0 %v464
        %544 = vmatprep.subr.bf16.mxu0 0
        %545 = vmatpush1.bf16.msra.mxu0 %v465
        %546 = vmatprep.subr.bf16.mxu0 0
        %547 = vmatpush1.bf16.msra.mxu0 %v466
        %548 = vmatprep.subr.bf16.mxu0 0
        %549 = vmatpush1.bf16.msra.mxu0 %v467
        %550 = vmatprep.subr.bf16.mxu0 0
        %551 = vmatpush1.bf16.msra.mxu0 %v468
        %552 = vmatprep.subr.bf16.mxu0 0
        %553 = vmatpush1.bf16.msra.mxu0 %v469
        %554 = vmatprep.subr.bf16.mxu0 0
        %555 = vmatpush1.bf16.msra.mxu0 %v534
        %556 = vmatprep.subr.bf16.mxu0 0
        %557 = vmatpush1.bf16.msra.mxu0 0
        %558 = vmatprep.subr.bf16.mxu0 0
        %559 = vmatpush1.bf16.msra.mxu0 0
        %560 = vmatprep.subr.bf16.mxu0 0
        %561 = vmatpush1.bf16.msra.mxu0 0
        %562 = vmatprep.subr.bf16.mxu0 0
        %563 = vmatpush1.bf16.msra.mxu0 0
        %564 = vmatprep.subr.bf16.mxu0 0
        %565 = vmatpush1.bf16.msra.mxu0 0
        %566 = vmatprep.subr.bf16.mxu0 0
        %567 = vmatpush1.bf16.msra.mxu0 0
        %568 = vmatprep.mubr.bf16.mxu0 %v482
        %569 = vmatmul.mubr.bf16.gmra.mrb[0].mxu0 %v375
        %v570 = vpop.f32.mrb[0].mxu0
        %v571 = vadd.f32 %v277, %v570
        %v572 = vpop.f32.mrb[0].mxu0
        %v573 = vpop.f32.mrb[0].mxu0
        %v574 = vadd.f32 %v277, %v573
        %v575 = vpop.f32.mrb[0].mxu0
        %576 = vmatprep.mubr.bf16.mxu0 %v485
        %577 = vmatmul.mubr.bf16.gmra.mrb[0].mxu0 %v377
        %v578 = vpop.f32.mrb[0].mxu0
        %v579 = vadd.f32 %v277, %v578
        %v580 = vpop.f32.mrb[0].mxu0
        %v581 = vpop.f32.mrb[0].mxu0
        %v582 = vadd.f32 %v277, %v581
        %v583 = vpop.f32.mrb[0].mxu0
        %584 = vmatprep.mubr.bf16.mxu0 %v488
        %585 = vmatmul.mubr.bf16.gmra.mrb[0].mxu0 %v379
        %v586 = vpop.f32.mrb[0].mxu0
        %v587 = vadd.f32 %v277, %v586
        %v588 = vpop.f32.mrb[0].mxu0
        %v589 = vpop.f32.mrb[0].mxu0
        %v590 = vadd.f32 %v277, %v589
        %v591 = vpop.f32.mrb[0].mxu0
        %592 = vmatprep.mubr.bf16.mxu0 %v491
        %593 = vmatmul.mubr.bf16.gmra.mrb[0].mxu0 %v381
        %v594 = vpop.f32.mrb[0].mxu0
        %v595 = vadd.f32 %v277, %v594
        %v596 = vpop.f32.mrb[0].mxu0
        %v597 = vpop.f32.mrb[0].mxu0
        %v598 = vadd.f32 %v277, %v597
        %v599 = vpop.f32.mrb[0].mxu0
        %600 = vmatprep.mubr.bf16.mxu0 %v494
        %601 = vmatmul.mubr.bf16.gmra.mrb[0].mxu0 %v383
        %v602 = vpop.f32.mrb[0].mxu0
        %v603 = vadd.f32 %v277, %v602
        %v604 = vpop.f32.mrb[0].mxu0
        %v605 = vpop.f32.mrb[0].mxu0
        %v606 = vadd.f32 %v277, %v605
        %v607 = vpop.f32.mrb[0].mxu0
        %608 = vmatprep.mubr.bf16.mxu0 %v497
        %609 = vmatmul.mubr.bf16.gmra.mrb[0].mxu0 %v385
        %v610 = vpop.f32.mrb[0].mxu0
        %v611 = vadd.f32 %v277, %v610
        %v612 = vpop.f32.mrb[0].mxu0
        %v613 = vpop.f32.mrb[0].mxu0
        %v614 = vadd.f32 %v277, %v613
        %v615 = vpop.f32.mrb[0].mxu0
        %616 = vmatprep.mubr.bf16.mxu0 %v500
        %617 = vmatmul.mubr.bf16.gmra.mrb[0].mxu0 %v387
        %v618 = vpop.f32.mrb[0].mxu0
        %v619 = vadd.f32 %v277, %v618
        %v620 = vpop.f32.mrb[0].mxu0
        %v621 = vpop.f32.mrb[0].mxu0
        %v622 = vadd.f32 %v277, %v621
        %v623 = vpop.f32.mrb[0].mxu0
        %624 = vmatprep.mubr.bf16.mxu0 %v503
        %625 = vmatmul.mubr.bf16.gmra.mrb[0].mxu0 %v389
        %v626 = vpop.f32.mrb[0].mxu0
        %v627 = vadd.f32 %v277, %v626
        %v628 = vpop.f32.mrb[0].mxu0
        %v629 = vpop.f32.mrb[0].mxu0
        %v630 = vadd.f32 %v277, %v629
        %v631 = vpop.f32.mrb[0].mxu0
        %632 = vmatprep.mubr.bf16.mxu0 %v506
        %633 = vmatmul.mubr.bf16.gmra.mrb[0].mxu0 %v391
        %v634 = vpop.f32.mrb[0].mxu0
        %v635 = vadd.f32 %v277, %v634
        %v636 = vpop.f32.mrb[0].mxu0
        %v637 = vpop.f32.mrb[0].mxu0
        %v638 = vadd.f32 %v277, %v637
        %v639 = vpop.f32.mrb[0].mxu0
        %640 = vmatprep.mubr.bf16.mxu0 %v509
        %641 = vmatmul.mubr.bf16.gmra.mrb[0].mxu0 %v393
        %v642 = vpop.f32.mrb[0].mxu0
        %v643 = vadd.f32 %v277, %v642
        %v644 = vpop.f32.mrb[0].mxu0
        %v645 = vpop.f32.mrb[0].mxu0
        %v646 = vadd.f32 %v277, %v645
        %v647 = vpop.f32.mrb[0].mxu0
        %648 = vmatprep.mubr.bf16.mxu0 %v512
        %649 = vmatmul.mubr.bf16.gmra.mrb[0].mxu0 %v395
        %v650 = vpop.f32.mrb[0].mxu0
        %v651 = vadd.f32 %v277, %v650
        %v652 = vpop.f32.mrb[0].mxu0
        %v653 = vpop.f32.mrb[0].mxu0
        %v654 = vadd.f32 %v277, %v653
        %v655 = vpop.f32.mrb[0].mxu0
        %656 = vmatprep.mubr.bf16.mxu0 %v515
        %657 = vmatmul.mubr.bf16.gmra.mrb[0].mxu0 %v397
        %v658 = vpop.f32.mrb[0].mxu0
        %v659 = vadd.f32 %v277, %v658
        %v660 = vpop.f32.mrb[0].mxu0
        %v661 = vpop.f32.mrb[0].mxu0
        %v662 = vadd.f32 %v277, %v661
        %v663 = vpop.f32.mrb[0].mxu0
        %664 = vmatprep.mubr.bf16.mxu0 %v518
        %665 = vmatmul.mubr.bf16.gmra.mrb[0].mxu0 %v399
        %v666 = vpop.f32.mrb[0].mxu0
        %v667 = vadd.f32 %v277, %v666
        %v668 = vpop.f32.mrb[0].mxu0
        %v669 = vpop.f32.mrb[0].mxu0
        %v670 = vadd.f32 %v277, %v669
        %v671 = vpop.f32.mrb[0].mxu0
        %672 = vmatprep.mubr.bf16.mxu0 %v521
        %673 = vmatmul.mubr.bf16.gmra.mrb[0].mxu0 %v401
        %v674 = vpop.f32.mrb[0].mxu0
        %v675 = vadd.f32 %v277, %v674
        %v676 = vpop.f32.mrb[0].mxu0
        %v677 = vpop.f32.mrb[0].mxu0
        %v678 = vadd.f32 %v277, %v677
        %v679 = vpop.f32.mrb[0].mxu0
        %680 = vmatprep.mubr.bf16.mxu0 %v524
        %681 = vmatmul.mubr.bf16.gmra.mrb[0].mxu0 %v403
        %v682 = vpop.f32.mrb[0].mxu0
        %v683 = vadd.f32 %v277, %v682
        %v684 = vpop.f32.mrb[0].mxu0
        %v685 = vpop.f32.mrb[0].mxu0
        %v686 = vadd.f32 %v277, %v685
        %v687 = vpop.f32.mrb[0].mxu0
        %688 = vmatprep.mubr.bf16.mxu0 %v527
        %689 = vmatmul.mubr.bf16.gmra.mrb[0].mxu0 %v405
        %v690 = vpop.f32.mrb[0].mxu0
        %v691 = vadd.f32 %v277, %v690
        %v692 = vpop.f32.mrb[0].mxu0
        %v693 = vpop.f32.mrb[0].mxu0
        %v694 = vadd.f32 %v277, %v693
        %v695 = vpop.f32.mrb[0].mxu0
        %696 = vdwg.mxu0
        %v697 = vmax.f32 %v571, 0.0
        %v698 = vmax.f32 %v574, 0.0
        %v699 = vmax.f32 %v579, 0.0
        %v700 = vmax.f32 %v582, 0.0
        %v701 = vmax.f32 %v587, 0.0
        %v702 = vmax.f32 %v590, 0.0
        %v703 = vmax.f32 %v595, 0.0
        %v704 = vmax.f32 %v598, 0.0
        %v705 = vmax.f32 %v603, 0.0
        %v706 = vmax.f32 %v606, 0.0
        %v707 = vmax.f32 %v611, 0.0
        %v708 = vmax.f32 %v614, 0.0
        %v709 = vmax.f32 %v619, 0.0
        %v710 = vmax.f32 %v622, 0.0
        %v711 = vmax.f32 %v627, 0.0
        %v712 = vmax.f32 %v630, 0.0
        %v713 = vmax.f32 %v635, 0.0
        %v714 = vmax.f32 %v638, 0.0
        %v715 = vmax.f32 %v643, 0.0
        %v716 = vmax.f32 %v646, 0.0
        %v717 = vmax.f32 %v651, 0.0
        %v718 = vmax.f32 %v654, 0.0
        %v719 = vmax.f32 %v659, 0.0
        %v720 = vmax.f32 %v662, 0.0
        %v721 = vmax.f32 %v667, 0.0
        %v722 = vmax.f32 %v670, 0.0
        %v723 = vmax.f32 %v675, 0.0
        %v724 = vmax.f32 %v678, 0.0
        %v725 = vmax.f32 %v683, 0.0
        %v726 = vmax.f32 %v686, 0.0
        %v727 = vmax.f32 %v691, 0.0
        %v728 = vmax.f32 %v694, 0.0
        %v729 = vpack.c.bf16 %v698, %v697
        %v730 = vpack.c.bf16 %v700, %v699
        %v731 = vpack.c.bf16 %v702, %v701
        %v732 = vpack.c.bf16 %v704, %v703
        %v733 = vpack.c.bf16 %v706, %v705
        %v734 = vpack.c.bf16 %v708, %v707
        %v735 = vpack.c.bf16 %v710, %v709
        %v736 = vpack.c.bf16 %v712, %v711
        %v737 = vpack.c.bf16 %v714, %v713
        %v738 = vpack.c.bf16 %v716, %v715
        %v739 = vpack.c.bf16 %v718, %v717
        %v740 = vpack.c.bf16 %v720, %v719
        %v741 = vpack.c.bf16 %v722, %v721
        %v742 = vpack.c.bf16 %v724, %v723
        %v743 = vpack.c.bf16 %v726, %v725
        %v744 = vpack.c.bf16 %v728, %v727
        %v761 = vunpack.c.l.b16 %v729
        %v762 = vunpack.c.h.b16 %v729
        %v763 = vunpack.c.l.b16 %v730
        %v764 = vunpack.c.h.b16 %v730
        %v765 = vunpack.c.l.b16 %v731
        %v766 = vunpack.c.h.b16 %v731
        %v767 = vunpack.c.l.b16 %v732
        %v768 = vunpack.c.h.b16 %v732
        %v769 = vunpack.c.l.b16 %v733
        %v770 = vunpack.c.h.b16 %v733
        %v771 = vunpack.c.l.b16 %v734
        %v772 = vunpack.c.h.b16 %v734
        %v773 = vunpack.c.l.b16 %v735
        %v774 = vunpack.c.h.b16 %v735
        %v775 = vunpack.c.l.b16 %v736
        %v776 = vunpack.c.h.b16 %v736
        %v777 = vunpack.c.l.b16 %v737
        %v778 = vunpack.c.h.b16 %v737
        %v779 = vunpack.c.l.b16 %v738
        %v780 = vunpack.c.h.b16 %v738
        %v781 = vunpack.c.l.b16 %v739
        %v782 = vunpack.c.h.b16 %v739
        %v783 = vunpack.c.l.b16 %v740
        %v784 = vunpack.c.h.b16 %v740
        %v785 = vunpack.c.l.b16 %v741
        %v786 = vunpack.c.h.b16 %v741
        %v787 = vunpack.c.l.b16 %v742
        %v788 = vunpack.c.h.b16 %v742
        %v789 = vunpack.c.l.b16 %v743
        %v790 = vunpack.c.h.b16 %v743
        %v791 = vunpack.c.l.b16 %v744
        %v792 = vunpack.c.h.b16 %v744
        %v793 = vpack.c.b16 %v761, %v761
        %v794 = vpack.c.b16 %v762, %v762
        %v795 = vpack.c.b16 %v763, %v763
        %v796 = vpack.c.b16 %v764, %v764
        %v797 = vpack.c.b16 %v765, %v765
        %v798 = vpack.c.b16 %v766, %v766
        %v799 = vpack.c.b16 %v767, %v767
        %v800 = vpack.c.b16 %v768, %v768
        %v801 = vpack.c.b16 %v769, %v769
        %v802 = vpack.c.b16 %v770, %v770
        %v803 = vpack.c.b16 %v771, %v771
        %v804 = vpack.c.b16 %v772, %v772
        %v805 = vpack.c.b16 %v773, %v773
        %v806 = vpack.c.b16 %v774, %v774
        %v807 = vpack.c.b16 %v775, %v775
        %v808 = vpack.c.b16 %v776, %v776
        %v809 = vpack.c.b16 %v777, %v777
        %v810 = vpack.c.b16 %v778, %v778
        %v811 = vpack.c.b16 %v779, %v779
        %v812 = vpack.c.b16 %v780, %v780
        %v813 = vpack.c.b16 %v781, %v781
        %v814 = vpack.c.b16 %v782, %v782
        %v815 = vpack.c.b16 %v783, %v783
        %v816 = vpack.c.b16 %v784, %v784
        %v817 = vpack.c.b16 %v785, %v785
        %v818 = vpack.c.b16 %v786, %v786
        %v819 = vpack.c.b16 %v787, %v787
        %v820 = vpack.c.b16 %v788, %v788
        %v821 = vpack.c.b16 %v789, %v789
        %v822 = vpack.c.b16 %v790, %v790
        %v823 = vpack.c.b16 %v791, %v791
        %v824 = vpack.c.b16 %v792, %v792
        %857 = vst [vmem:[%s204] sm:$0xf] %v793
        %858 = vst [vmem:[%s204 + $0x4] sm:$0xf] %v794
        %859 = vst [vmem:[%s204 + $0x8] sm:$0xf] %v795
        %860 = vst [vmem:[%s204 + $0xc] sm:$0xf] %v796
        %861 = vst [vmem:[%s204 + $0x10] sm:$0xf] %v797
        %862 = vst [vmem:[%s204 + $0x14] sm:$0xf] %v798
        %863 = vst [vmem:[%s204 + $0x18] sm:$0xf] %v799
        %864 = vst [vmem:[%s204 + $0x1c] sm:$0xf] %v800
        %865 = vst [vmem:[%s204 + $0x20] sm:$0xf] %v801
        %866 = vst [vmem:[%s204 + $0x24] sm:$0xf] %v802
        %867 = vst [vmem:[%s204 + $0x28] sm:$0xf] %v803
        %868 = vst [vmem:[%s204 + $0x2c] sm:$0xf] %v804
        %869 = vst [vmem:[%s204 + $0x30] sm:$0xf] %v805
        %870 = vst [vmem:[%s204 + $0x34] sm:$0xf] %v806
        %871 = vst [vmem:[%s204 + $0x38] sm:$0xf] %v807
        %872 = vst [vmem:[%s204 + $0x3c] sm:$0xf] %v808
        %873 = vst [vmem:[%s204 + $0x40] sm:$0xf] %v809
        %874 = vst [vmem:[%s204 + $0x44] sm:$0xf] %v810
        %875 = vst [vmem:[%s204 + $0x48] sm:$0xf] %v811
        %876 = vst [vmem:[%s204 + $0x4c] sm:$0xf] %v812
        %877 = vst [vmem:[%s204 + $0x50] sm:$0xf] %v813
        %878 = vst [vmem:[%s204 + $0x54] sm:$0xf] %v814
        %879 = vst [vmem:[%s204 + $0x58] sm:$0xf] %v815
        %880 = vst [vmem:[%s204 + $0x5c] sm:$0xf] %v816
        %881 = vst [vmem:[%s204 + $0x60] sm:$0xf] %v817
        %882 = vst [vmem:[%s204 + $0x64] sm:$0xf] %v818
        %883 = vst [vmem:[%s204 + $0x68] sm:$0xf] %v819
        %884 = vst [vmem:[%s204 + $0x6c] sm:$0xf] %v820
        %885 = vst [vmem:[%s204 + $0x70] sm:$0xf] %v821
        %886 = vst [vmem:[%s204 + $0x74] sm:$0xf] %v822
        %887 = vst [vmem:[%s204 + $0x78] sm:$0xf] %v823
        %888 = vst [vmem:[%s204 + $0x7c] sm:$0xf] %v824
        %s889 = sand.u32 %s117, 1
        %s890 = scalar_lea.sflag [#allocation3], %s889
        %s891 = sand.u32 %s117, 1
        %s892 = smul.addr %s891, 128
        %s893 = scalar_lea.vmem [#allocation2], %s892
        // Predicated region
        $region33: #{tpu_custom_call.1} parent=31 // pred_check
          %p894 = pneg %p127
        $region34: #{tpu_custom_call.1} parent=31 // pred_check_branch
          %896 = sbr.rel (%p894) target = $region36
        $region35: #{tpu_custom_call.1} parent=31 // pred_region
          %s897 = smul.u32 32, %s22
          %s899 = ssub.s32 2048, 2048
          %900 = vsyncadd %s890, %s899
          %s901 = sadd.s32 %s21, %s897
          %s902 = smul.addr %s901, 64
          %s903 = scalar_lea.hbm %s3, %s902
          %s904 = sshll.u32 %s893, 4
          %s905 = int_to_ptr.vmem [resolvable:$true] %s904
          %910 = dma.vmem_to_hbm [thread:$0]  %s905, 2048, %s903, %s890, 64, 64, 4
        $region36: #{tpu_custom_call.1} parent=31 // pred_fallthru
          _
      $region32: #{tpu_custom_call.1} parent=5 // pred_fallthru
        _
      %p911 = scmp.le.s32.totalorder 2, %s12
      // Predicated region
      $region37: #{tpu_custom_call.1} parent=5 // pred_check
        %p912 = pneg %p911
      $region38: #{tpu_custom_call.1} parent=5 // pred_check_branch
        %914 = sbr.rel (%p912) target = $region40
      $region39: #{tpu_custom_call.1} parent=5 // pred_region
        %s915 = ssub.s32 %s12, 2
        // Predicated region
        $region41: #{tpu_custom_call.1} parent=39 // pred_check
          %p916 = pneg %p133
        $region42: #{tpu_custom_call.1} parent=39 // pred_check_branch
          %918 = sbr.rel (%p916) target = $region44
        $region43: #{tpu_custom_call.1} parent=39 // pred_region
          %s919 = sand.u32 %s118, 1
          %s920 = scalar_lea.sflag [#allocation3], %s919
          %s921 = sand.u32 %s118, 1
          %s922 = smul.addr %s921, 128
          %s923 = scalar_lea.vmem [#allocation2], %s922
          %924 = dma.done %s920, 2048
        $region44: #{tpu_custom_call.1} parent=39 // pred_fallthru
          _
      $region40: #{tpu_custom_call.1} parent=5 // pred_fallthru
        _
    $region6: #{tpu_custom_call.1} parent=1 // loop_footer
      %s16 = sadd.s32 1, %s12
    $region7: #{tpu_custom_call.1} parent=1 // loop_footer_branch
      %11 = sbr.rel target = $region3
    $region8: #{tpu_custom_call.1} parent=1 // loop_exit
      _
    %925 = vsyncpa [#allocation3], 1
    %s926 = scalar_lea.sflag [#allocation3], 1
    %927 = vsyncpa %s926, 1

</llo_original>
